<compile_context>
chip_gen: v5e
topology: v5e:2x2
jax: 0.10.0
libtpu: 0.0.40
codegen_flags: <defaults>
</compile_context>

<pallas_src>
import functools

import jax
import jax.numpy as jnp
from jax.experimental import pallas as pl
from jax.experimental.pallas import tpu as pltpu


# ----------------------------------------------------------------------------
# Kernels
# ----------------------------------------------------------------------------
def _agg_mlp_kernel(x_ref, mask_ref, w_ref, b_ref, o_ref):
    # x_ref:    (bb, G, D_in)   bb batch rows per grid step
    # mask_ref: (bb, G)
    # w_ref:    (D_in, tn)      bf16, constant along the batch grid axis
    # b_ref:    (1, tn)
    # o_ref:    (bb, tn)
    bb, g, d_in = x_ref.shape
    tn = o_ref.shape[-1]

    # Flatten groups into MXU rows (layout-free when G % 8 == 0) and cast to
    # the weight dtype (bf16) so the matmul runs at native MXU precision.
    # TODO(synk): for G not a multiple of 8, flatten x in the wrapper instead
    # to avoid a per-step VMEM relayout.
    x = x_ref[...].reshape(bb * g, d_in).astype(w_ref.dtype)
    z = jnp.dot(x, w_ref[...], preferred_element_type=jnp.float32)
    z = z + b_ref[...].astype(jnp.float32)
    h = jnp.tanh(jnp.maximum(z, 0.0)).reshape(bb, g, tn)      # tanh(relu(.))

    m = jnp.exp(mask_ref[...].astype(jnp.float32))            # (bb, G)
    # VPU multiply + cross-sublane reduce over the group axis (no M=1 matmul).
    num = jnp.sum(h * m[:, :, None], axis=1)                  # (bb, tn)
    den = jnp.sum(m, axis=-1, keepdims=True)                  # (bb, 1)
    o_ref[...] = (num * pl.reciprocal(den, approx=True)).astype(o_ref.dtype)


def _agg_pool_kernel(x_ref, mask_ref, o_ref):
    # mlp=False path: pure bandwidth kernel, h = x.
    h = x_ref[...].astype(jnp.float32)                        # (bb, G, D)
    m = jnp.exp(mask_ref[...].astype(jnp.float32))            # (bb, G)
    num = jnp.sum(h * m[:, :, None], axis=1)                  # (bb, D)
    den = jnp.sum(m, axis=-1, keepdims=True)                  # (bb, 1)
    o_ref[...] = (num * pl.reciprocal(den, approx=True)).astype(o_ref.dtype)


# ----------------------------------------------------------------------------
# Generation-aware VMEM sizing
# ----------------------------------------------------------------------------
def _rup(x, m):
    return -(-x // m) * m


@functools.lru_cache(maxsize=1)
def _vmem_config():
    """(vmem_limit_bytes, tile_budget_bytes) per TPU generation."""
    cap = 64 * 1024 * 1024                  # conservative default: v7x per-TC
    try:
        cap = int(pltpu.get_tpu_info().vmem_capacity_bytes)
    except Exception:
        pass                                # hardware introspection only
    if cap >= 100 * 1024 * 1024:            # v5e / v6e: 128 MiB physical VMEM
        return 96 * 1024 * 1024, 40 * 1024 * 1024
    return 48 * 1024 * 1024, 20 * 1024 * 1024   # v7x: 64 MiB per TensorCore


def _pick_tn(d_out):
    """D_out tile: full dim for typical sizes; 128-lane-dense tiles when the
    resident weight block would otherwise blow the VMEM budget (v7x 64 MiB)."""
    if d_out <= 1024:
        return int(d_out)
    return 512


def _pick_bb(B, G, D_in, tn, x_itemsize, mlp, tile_budget):
    """Largest batch block (multiple of 8) whose double-buffered input/output
    blocks + in-kernel f32 intermediates fit the per-generation tile budget."""
    g_p = _rup(G, 8)                        # group axis -> sublanes
    din_p = _rup(D_in, 128)                 # feature axes -> lanes
    tn_p = _rup(tn, 128)

    # Bytes per batch row, lane/sublane-padding aware.
    per_row = 2 * g_p * din_p * x_itemsize          # x block (double-buffered)
    per_row += 2 * _rup(G, 128) * 4                 # mask block (double-buffered)
    per_row += 2 * tn_p * 4                         # output block (double-buffered)
    if mlp:
        per_row += g_p * din_p * 2                  # bf16 cast of x for the MXU
        per_row += 3 * g_p * tn_p * 4               # z / h / h*m f32 intermediates
    else:
        per_row += 2 * g_p * din_p * 4              # f32 cast of x + weighted prod

    fixed = 0
    if mlp:
        fixed += 2 * _rup(D_in, 16) * tn_p * 2      # bf16 W block (double-buffered)
        fixed += 2 * 8 * tn_p * 4                   # bias block

    avail = max(tile_budget - fixed, 8 * per_row)
    bb = max(8, int(avail // per_row))
    bb = min(bb, 4096)                              # keep per-step DMA granular

    if bb >= B:
        if B >= 16:
            # Keep >=2 grid steps so both v7x TensorCores get work.
            bb = _rup(-(-B // 2), 8)
        else:
            bb = B
    else:
        bb = max(8, (bb // 8) * 8)                  # sublane-aligned blocks
    return int(bb)


# ----------------------------------------------------------------------------
# Wrapper
# ----------------------------------------------------------------------------
@functools.partial(jax.jit,
                   static_argnames=("mlp", "bb", "tn", "vmem_limit", "out_dtype"))
def _mean_pool_agg(x, mask, w, b, *, mlp, bb, tn, vmem_limit, out_dtype):
    B, G, D_in = x.shape
    nb = pl.cdiv(B, bb)

    if mlp:
        D_out = w.shape[1]
        nj = pl.cdiv(D_out, tn)
        # Grid order (nb, nj): j innermost so the (bigger) x block is DMA'd
        # once per batch tile and only the W tile cycles along j.
        return pl.pallas_call(
            _agg_mlp_kernel,
            out_shape=jax.ShapeDtypeStruct((B, D_out), out_dtype),
            grid_spec=pltpu.PrefetchScalarGridSpec(
                num_scalar_prefetch=0,
                grid=(nb, nj),
                in_specs=[
                    pl.BlockSpec((bb, G, D_in), lambda i, j: (i, 0, 0)),
                    pl.BlockSpec((bb, G), lambda i, j: (i, 0)),
                    pl.BlockSpec((D_in, tn), lambda i, j: (0, j)),
                    pl.BlockSpec((1, tn), lambda i, j: (0, j)),
                ],
                out_specs=pl.BlockSpec((bb, tn), lambda i, j: (i, j)),
            ),
            compiler_params=pltpu.CompilerParams(
                dimension_semantics=("parallel", "parallel"),
                vmem_limit_bytes=vmem_limit),
        )(x, mask, w, b)
    else:
        return pl.pallas_call(
            _agg_pool_kernel,
            out_shape=jax.ShapeDtypeStruct((B, D_in), out_dtype),
            grid_spec=pltpu.PrefetchScalarGridSpec(
                num_scalar_prefetch=0,
                grid=(nb,),
                in_specs=[
                    pl.BlockSpec((bb, G, D_in), lambda i: (i, 0, 0)),
                    pl.BlockSpec((bb, G), lambda i: (i, 0)),
                ],
                out_specs=pl.BlockSpec((bb, D_in), lambda i: (i, 0)),
            ),
            compiler_params=pltpu.CompilerParams(
                dimension_semantics=("parallel",),
                vmem_limit_bytes=vmem_limit),
        )(x, mask)


class MeanPoolAggregatorPallas:
    """Pallas port of MeanPoolAggregator (eval mode)."""
    # TODO(synk): nn.Dropout(drop_ratio) is identity in eval mode; training-mode
    # dropout is not implemented.

    def __init__(self, input_dim, output_dim, drop_ratio=0, key=None):
        if key is None:
            key = jax.random.PRNGKey(0)
        # PyTorch xavier_uniform_ on weight of shape (out, in):
        # bound = sqrt(6 / (fan_in + fan_out))
        bound = (6.0 / (input_dim + output_dim)) ** 0.5
        w_torch = jax.random.uniform(
            key, (output_dim, input_dim), jnp.float32, -bound, bound)
        # Stored as (D_in, D_out) bf16: MXU-native, half the weight DMA / VMEM.
        self.w = jnp.transpose(w_torch).astype(jnp.bfloat16)
        self.b = jnp.zeros((1, output_dim), jnp.float32)
        self.input_dim = input_dim
        self.output_dim = output_dim

    def __call__(self, x, mask, mlp=True, out_dtype=jnp.float32):
        B, G, D = x.shape
        if mask is None:
            # exp(0)=1 -> uniform weights, denominator = G -> exact plain mean.
            mask = jnp.zeros((B, G), jnp.float32)
        vmem_limit, tile_budget = _vmem_config()
        tn = _pick_tn(self.output_dim) if mlp else D
        bb = _pick_bb(B, G, D, tn, jnp.dtype(x.dtype).itemsize, mlp, tile_budget)
        return _mean_pool_agg(x, mask, self.w, self.b, mlp=mlp, bb=bb, tn=tn,
                              vmem_limit=vmem_limit, out_dtype=out_dtype)


# ----------------------------------------------------------------------------
# Reference + test
# ----------------------------------------------------------------------------
def _reference(x, mask, w, b, mlp=True):
    x = x.astype(jnp.float32)
    if mlp:
        h = jnp.tanh(jnp.maximum(x @ w + b, 0.0))
    else:
        h = x
    if mask is None:
        return jnp.mean(h, axis=1)
    m = jnp.exp(mask.astype(jnp.float32))
    return jnp.sum(h * m[:, :, None], axis=1) / jnp.sum(m, axis=1, keepdims=True)


if __name__ == "__main__":
    B, G, D_IN, D_OUT = 2, 8, 32, 32
    TOL_MLP = 1e-2   # bf16 weights/activations on the MXU + approx reciprocal
    TOL_POOL = 2e-3  # f32 pooling path, approx-EUP reciprocal only

    key = jax.random.PRNGKey(0)
    kx, km, kw = jax.random.split(key, 3)
    x = jax.random.normal(kx, (B, G, D_IN), jnp.float32)
    mask = jax.random.normal(km, (B, G), jnp.float32)

    agg = MeanPoolAggregatorPallas(D_IN, D_OUT, drop_ratio=0, key=kw)

    # mlp=True, with mask
    out = jax.block_until_ready(agg(x, mask, mlp=True))
    ref = _reference(x, mask, agg.w, agg.b, mlp=True)
    assert out.shape == (B, D_OUT)
    assert jnp.allclose(out, ref, atol=TOL_MLP, rtol=TOL_MLP)

    # mlp=True, mask=None (plain mean)
    out2 = jax.block_until_ready(agg(x, None, mlp=True))
    ref2 = _reference(x, None, agg.w, agg.b, mlp=True)
    assert jnp.allclose(out2, ref2, atol=TOL_MLP, rtol=TOL_MLP)

    # mlp=False path (pure masked mean pool, f32)
    out3 = jax.block_until_ready(agg(x, mask, mlp=False))
    ref3 = _reference(x, mask, agg.w, agg.b, mlp=False)
    assert jnp.allclose(out3, ref3, atol=TOL_POOL, rtol=TOL_POOL)

    # mlp=False with bf16 input pass-through (no host-side upcast)
    xb = x.astype(jnp.bfloat16)
    out4 = jax.block_until_ready(agg(xb, mask, mlp=False))
    ref4 = _reference(xb, mask, agg.w, agg.b, mlp=False)
    assert jnp.allclose(out4, ref4, atol=1e-2, rtol=1e-2)

    # Medium B: >=2 grid steps (v7x 2-TC sharding) + partial final block.
    B2 = 40
    kx2, km2 = jax.random.split(jax.random.PRNGKey(1))
    x2 = jax.random.normal(kx2, (B2, G, D_IN), jnp.float32)
    mask2 = jax.random.normal(km2, (B2, G), jnp.float32)
    out5 = jax.block_until_ready(agg(x2, mask2, mlp=True))
    ref5 = _reference(x2, mask2, agg.w, agg.b, mlp=True)
    assert out5.shape == (B2, D_OUT)
    assert jnp.allclose(out5, ref5, atol=TOL_MLP, rtol=TOL_MLP)

    # Large B: VMEM-budget-limited bb (multi-MiB tiles), multi-step grid.
    B3 = 2048
    kx3, km3 = jax.random.split(jax.random.PRNGKey(2))
    x3 = jax.random.normal(kx3, (B3, G, D_IN), jnp.float32)
    mask3 = jax.random.normal(km3, (B3, G), jnp.float32)
    out6 = jax.block_until_ready(agg(x3, mask3, mlp=True))
    ref6 = _reference(x3, mask3, agg.w, agg.b, mlp=True)
    assert out6.shape == (B3, D_OUT)
    assert jnp.allclose(out6, ref6, atol=TOL_MLP, rtol=TOL_MLP)

    print("KERNEL_OK")
</pallas_src>

<mosaic_0001>
module attributes {stable_mosaic.version = 11 : i64} {
  func.func @_agg_mlp_kernel(%arg0: i32, %arg1: i32, %arg2: memref<2x8x32xf32, #tpu.memory_space<vmem>>, %arg3: memref<2x8xf32, #tpu.memory_space<vmem>>, %arg4: memref<32x32xbf16, #tpu.memory_space<vmem>>, %arg5: memref<1x32xf32, #tpu.memory_space<vmem>>, %arg6: memref<2x32xf32, #tpu.memory_space<vmem>>) attributes {dimension_semantics = [#tpu.dimension_semantics<parallel>, #tpu.dimension_semantics<parallel>], iteration_bounds = array<i64: 1, 1>, scalar_prefetch = 0 : i64, scratch_operands = 0 : i64, tpu.core_type = #tpu.core_type<tc>, window_params = [{transform_indices = @transform_0, window_bounds = array<i64: 2, 8, 32>}, {transform_indices = @transform_1, window_bounds = array<i64: 2, 8>}, {transform_indices = @transform_2, window_bounds = array<i64: 32, 32>}, {transform_indices = @transform_3, window_bounds = array<i64: 1, 32>}, {transform_indices = @transform_4, window_bounds = array<i64: 2, 32>}]} {
    %c0 = arith.constant 0 : index
    %c0_0 = arith.constant 0 : index
    %c0_1 = arith.constant 0 : index
    %0 = vector.load %arg2[%c0, %c0_0, %c0_1] : memref<2x8x32xf32, #tpu.memory_space<vmem>>, vector<2x8x32xf32>
    %1 = vector.shape_cast %0 : vector<2x8x32xf32> to vector<16x32xf32>
    %2 = arith.truncf %1 : vector<16x32xf32> to vector<16x32xbf16>
    %c0_2 = arith.constant 0 : index
    %c0_3 = arith.constant 0 : index
    %3 = vector.load %arg4[%c0_2, %c0_3] : memref<32x32xbf16, #tpu.memory_space<vmem>>, vector<32x32xbf16>
    %cst = arith.constant dense<0.000000e+00> : vector<16x32xf32>
    %4 = tpu.matmul %2, %3, %cst {dimension_numbers = #tpu.dot_dimension_numbers<[1], [0], [0], [1], [0, 0, 1, 1], [], []>} : vector<16x32xbf16>, vector<32x32xbf16>, vector<16x32xf32> -> vector<16x32xf32>
    %c0_4 = arith.constant 0 : index
    %c0_5 = arith.constant 0 : index
    %5 = vector.load %arg5[%c0_4, %c0_5] : memref<1x32xf32, #tpu.memory_space<vmem>>, vector<1x32xf32>
    %6 = vector.broadcast %5 : vector<1x32xf32> to vector<16x32xf32>
    %7 = arith.addf %4, %6 : vector<16x32xf32>
    %cst_6 = arith.constant 0.000000e+00 : f32
    %8 = vector.broadcast %cst_6 : f32 to vector<16x32xf32>
    %9 = arith.maximumf %7, %8 : vector<16x32xf32>
    %10 = math.tanh %9 : vector<16x32xf32>
    %11 = vector.shape_cast %10 : vector<16x32xf32> to vector<2x8x32xf32>
    %c0_7 = arith.constant 0 : index
    %c0_8 = arith.constant 0 : index
    %12 = vector.load %arg3[%c0_7, %c0_8] : memref<2x8xf32, #tpu.memory_space<vmem>>, vector<2x8xf32>
    %13 = math.exp %12 : vector<2x8xf32>
    %14 = vector.shape_cast %13 : vector<2x8xf32> to vector<2x8x1xf32>
    %15 = vector.broadcast %14 : vector<2x8x1xf32> to vector<2x8x32xf32>
    %16 = arith.mulf %11, %15 : vector<2x8x32xf32>
    %cst_9 = arith.constant dense<0.000000e+00> : vector<2x32xf32>
    %17 = vector.multi_reduction <add>, %16, %cst_9 [1] : vector<2x8x32xf32> to vector<2x32xf32>
    %cst_10 = arith.constant dense<0.000000e+00> : vector<2xf32>
    %18 = vector.multi_reduction <add>, %13, %cst_10 [1] : vector<2x8xf32> to vector<2xf32>
    %19 = vector.shape_cast %18 : vector<2xf32> to vector<2x1xf32>
    %20 = tpu.reciprocal %19 {approx = true} : vector<2x1xf32> -> vector<2x1xf32>
    %21 = vector.broadcast %20 : vector<2x1xf32> to vector<2x32xf32>
    %22 = arith.mulf %17, %21 : vector<2x32xf32>
    %c0_11 = arith.constant 0 : index
    %c0_12 = arith.constant 0 : index
    %23 = vector.load %arg6[%c0_11, %c0_12] : memref<2x32xf32, #tpu.memory_space<vmem>>, vector<2x32xf32>
    tpu.vector_store %arg6[%c0_11, %c0_12], %22 {strides = array<i32>} : memref<2x32xf32, #tpu.memory_space<vmem>>, vector<2x32xf32>,
    return
  }
  func.func @transform_0(%arg0: i32, %arg1: i32) -> (i32, i32, i32) {
    %c0_i32 = arith.constant 0 : i32
    %c0_i32_0 = arith.constant 0 : i32
    %c0_i32_1 = arith.constant 0 : i32
    return %arg0, %c0_i32, %c0_i32_0 : i32, i32, i32
  }
  func.func @transform_1(%arg0: i32, %arg1: i32) -> (i32, i32) {
    %c0_i32 = arith.constant 0 : i32
    %c0_i32_0 = arith.constant 0 : i32
    return %arg0, %c0_i32 : i32, i32
  }
  func.func @transform_2(%arg0: i32, %arg1: i32) -> (i32, i32) {
    %c0_i32 = arith.constant 0 : i32
    %c0_i32_0 = arith.constant 0 : i32
    return %c0_i32, %arg1 : i32, i32
  }
  func.func @transform_3(%arg0: i32, %arg1: i32) -> (i32, i32) {
    %c0_i32 = arith.constant 0 : i32
    %c0_i32_0 = arith.constant 0 : i32
    return %c0_i32, %arg1 : i32, i32
  }
  func.func @transform_4(%arg0: i32, %arg1: i32) -> (i32, i32) {
    %c0_i32 = arith.constant 0 : i32
    return %arg0, %arg1 : i32, i32
  }
}

</mosaic_0001>

<llo_original>
// kernel: _mean_pool_agg.1
$region0: #{_mean_pool_agg.1}
  #allocation0 [shape = 'u32[]', space=smem, size = 0x4, offset = 0x4, fixed_abs, tag = 'smem constant byte address 0x4 - core index']
  #allocation1 [shape = 'u32[72,128]{1,0:T(1,128)}', space=vmem, size = 0x9000, scoped, tag = 'internal scratch']
  %s0 = inlined_call_operand.hbm [shape: f32[2,8,32], index: 0, kind: input, shape index: {}]
  %s1 = inlined_call_operand.hbm [shape: f32[2,8], index: 1, kind: input, shape index: {}]
  %s2 = inlined_call_operand.hbm [shape: bf16[32,32], index: 2, kind: input, shape index: {}]
  %s3 = inlined_call_operand.vmem [shape: f32[1,32], index: 3, kind: input, shape index: {}]
  %s4 = inlined_call_operand.hbm [shape: f32[2,32], index: 4, kind: output, shape index: {}]
  %s5 = sld [smem:[#allocation0]]
  $region38: #{_mean_pool_agg.1} parent=0
    _
  %s7 = ssub.s32 1, %s5
  %s8 = scalar_select 0, %s7, %s5
  $region1: #{_mean_pool_agg.1} parent=0
    #allocation2 [shape = 'u8[8192]{0}', space=vmem, size = 0x2000, scoped, tag = 'input window, operand 0, single buffered']
    #allocation3 [shape = 's32[1]{0}', space=sflag, size = 0x4, scoped, tag = 'scoped memory for _mean_pool_agg.1']
    #allocation4 [shape = 's32[1]{0}', space=sflag, size = 0x4, scoped, tag = 'scoped memory for _mean_pool_agg.1']
    #allocation5 [shape = 'u8[1024]{0}', space=vmem, size = 0x400, scoped, tag = 'input window, operand 1, single buffered']
    #allocation6 [shape = 's32[1]{0}', space=sflag, size = 0x4, scoped, tag = 'scoped memory for _mean_pool_agg.1']
    #allocation7 [shape = 'u8[8192]{0}', space=vmem, size = 0x2000, scoped, tag = 'input window, operand 2, single buffered']
    #allocation8 [shape = 'u8[1024]{0}', space=vmem, size = 0x400, scoped, tag = 'output window, operand 0, single buffered']
    %9 = vsyncpa [#allocation3], 0
    %10 = vsyncpa [#allocation6], 0
    %11 = vsyncpa [#allocation4], 0
    // Predicated region
    $region2: #{_mean_pool_agg.1} parent=1 // pred_check
      _
    $region3: #{_mean_pool_agg.1} parent=1 // pred_check_branch
      %13 = sbr.rel (0) target = $region5
    $region4: #{_mean_pool_agg.1} parent=1 // pred_region
      %15 = vsyncadd [#allocation3], 0
      %s16 = sshll.u32 %s0, 4
      %s17 = int_to_ptr.hbm [resolvable:$true] %s16
      %s18 = sshll.u32 [#allocation2], 4
      %s19 = int_to_ptr.vmem [resolvable:$true] %s18
      %24 = dma.hbm_to_vmem [thread:$0]  %s17, 256, %s19, [#allocation3], 128, 128, 8
    $region5: #{_mean_pool_agg.1} parent=1 // pred_fallthru
      _
    // Predicated region
    $region6: #{_mean_pool_agg.1} parent=1 // pred_check
      _
    $region7: #{_mean_pool_agg.1} parent=1 // pred_check_branch
      %26 = sbr.rel (0) target = $region9
    $region8: #{_mean_pool_agg.1} parent=1 // pred_region
      %28 = vsyncadd [#allocation6], 0
      %s30 = sshll.u32 %s1, 4
      %s31 = int_to_ptr.hbm [resolvable:$true] %s30
      %s32 = sshll.u32 [#allocation5], 4
      %s33 = int_to_ptr.vmem [resolvable:$true] %s32
      %35 = dma.hbm_to_vmem [thread:$0]  %s31, 32, %s33, [#allocation6]
    $region9: #{_mean_pool_agg.1} parent=1 // pred_fallthru
      _
    // Predicated region
    $region10: #{_mean_pool_agg.1} parent=1 // pred_check
      _
    $region11: #{_mean_pool_agg.1} parent=1 // pred_check_branch
      %37 = sbr.rel (0) target = $region13
    $region12: #{_mean_pool_agg.1} parent=1 // pred_region
      %39 = vsyncadd [#allocation6], 0
      %s40 = sshll.u32 %s2, 4
      %s41 = int_to_ptr.hbm [resolvable:$true] %s40
      %s42 = sshll.u32 [#allocation7], 4
      %s43 = int_to_ptr.vmem [resolvable:$true] %s42
      %48 = dma.hbm_to_vmem [thread:$0]  %s41, 256, %s43, [#allocation6], 64, 64, 4
    $region13: #{_mean_pool_agg.1} parent=1 // pred_fallthru
      _
    // Predicated region
    $region14: #{_mean_pool_agg.1} parent=1 // pred_check
      _
    $region15: #{_mean_pool_agg.1} parent=1 // pred_check_branch
      %50 = sbr.rel (0) target = $region17
    $region16: #{_mean_pool_agg.1} parent=1 // pred_region
      _
    $region17: #{_mean_pool_agg.1} parent=1 // pred_fallthru
      _
    // Predicated region
    $region18: #{_mean_pool_agg.1} parent=1 // pred_check
      _
    $region19: #{_mean_pool_agg.1} parent=1 // pred_check_branch
      %52 = sbr.rel (0) target = $region21
    $region20: #{_mean_pool_agg.1} parent=1 // pred_region
      %54 = dma.done [#allocation3], 256
    $region21: #{_mean_pool_agg.1} parent=1 // pred_fallthru
      _
    // Predicated region
    $region22: #{_mean_pool_agg.1} parent=1 // pred_check
      _
    $region23: #{_mean_pool_agg.1} parent=1 // pred_check_branch
      %56 = sbr.rel (0) target = $region25
    $region24: #{_mean_pool_agg.1} parent=1 // pred_region
      %58 = dma.done [#allocation6], 32
    $region25: #{_mean_pool_agg.1} parent=1 // pred_fallthru
      _
    // Predicated region
    $region26: #{_mean_pool_agg.1} parent=1 // pred_check
      _
    $region27: #{_mean_pool_agg.1} parent=1 // pred_check_branch
      %60 = sbr.rel (0) target = $region29
    $region28: #{_mean_pool_agg.1} parent=1 // pred_region
      %62 = dma.done [#allocation6], 256
    $region29: #{_mean_pool_agg.1} parent=1 // pred_fallthru
      _
    %v64 = vld [vmem:[#allocation2] sm:$0xff]
    %v65 = vld [vmem:[#allocation2 + $0x8] sm:$0xff]
    %v66 = vpack.c.bf16 %v65, %v64
    %v67 = vld [vmem:[#allocation7] sm:$0xf]
    %v68 = vld [vmem:[#allocation7 + $0x4] sm:$0xf]
    %v69 = vld [vmem:[#allocation7 + $0x8] sm:$0xf]
    %v70 = vld [vmem:[#allocation7 + $0xc] sm:$0xf]
    %v71 = vld [vmem:[%s3] sm:$0x1]
    %v73 = vperm.slane %v71, 0
    %v79 = vunpack.c.l.b16 %v67
    %v80 = vunpack.c.l.b16 %v68
    %v81 = vunpack.c.l.b16 %v69
    %v82 = vunpack.c.l.b16 %v70
    %v83 = vpack.c.b16 %v80, %v79
    %v84 = vpack.c.b16 %v82, %v81
    %vm87 = vcmask 261120
    %v89 = vsel %vm87, %v66, 0
    %91 = vmatpush.bf16.msra.mxu0 0
    %92 = vmatpush.bf16.msra.mxu0 0
    %93 = vmatpush.bf16.msra.mxu0 0
    %94 = vmatpush.bf16.msra.mxu0 0
    %95 = vmatpush.bf16.msra.mxu0 0
    %96 = vmatpush.bf16.msra.mxu0 0
    %97 = vmatpush.bf16.msra.mxu0 %v84
    %98 = vmatpush.bf16.msra.mxu0 %v83
    %99 = vmatmul.bf16.gmra.mxu0 %v89
    %v100 = vpop.f32.mrf.mxu0
    %v101 = vadd.f32 %v73, %v100
    %v102 = vpop.f32.mrf.mxu0
    %v103 = vadd.f32 %v73, %v102
    %104 = vdwg.mxu0
    %v105 = vmax.f32 %v101, 0.0
    %v106 = vmax.f32 %v103, 0.0
    %v107 = vtanh.pop %v105
    %v108 = vtanh.pop %v106
    %v109 = vld [vmem:[#allocation5] sm:$0x3]
    %v110 = vmul.f32 %v109, 1.442695
    %v111 = vpow.pop %v110
    %v112 = vperm.slane %v111, 0
    %v113 = vlaneseq
    %v114 = vshrl.u32 %v113, 7
    %116 = vset.pattern.permute.xlu0 %v114
    %117 = vperm.xlu0 %116, %v112
    %v118 = vpop.permute.xlu0 %117
    %v119 = vperm.slane %v111, 1
    %v120 = vlaneseq
    %v121 = vshrl.u32 %v120, 7
    %123 = vset.pattern.permute.xlu0 %v121
    %124 = vperm.xlu0 %123, %v119
    %v125 = vpop.permute.xlu0 %124
    %v126 = vmul.f32 %v107, %v118
    %v127 = vmul.f32 %v108, %v125
    %v128 = vsel %vm87, %v126, 0.0
    %v129 = vrot.slane %v128, 4
    %v130 = vadd.f32 %v128, %v129
    %v131 = vrot.slane %v130, 2
    %v132 = vadd.f32 %v130, %v131
    %v133 = vrot.slane %v132, 1
    %v134 = vadd.f32 %v132, %v133
    %v135 = vsel %vm87, %v127, 0.0
    %v136 = vrot.slane %v135, 4
    %v137 = vadd.f32 %v135, %v136
    %v138 = vrot.slane %v137, 2
    %v139 = vadd.f32 %v137, %v138
    %v140 = vrot.slane %v139, 1
    %v141 = vadd.f32 %v139, %v140
    %vm142 = vcmask 58368
    %v143 = vsel %vm142, %v111, 0.0
    %144 = vadd.xlane.f32.xlu0 %v143
    %v145 = vpop.xlane.xlu0 %144
    %v146 = vrcp.pop %v145
    %v148 = vrot.slane %v146, 1
    %v151 = vmul.f32 %v134, %v146
    %v152 = vmul.f32 %v141, %v148
    %v155 = vrot.slane %v152, 7
    %vm156 = vcmask 1041409
    %v157 = vsel %vm156, %v155, %v151
    %vm159 = vcmask 254976
    %160 = vst.msk [vmem:[#allocation8] sm:$0x3] %vm159, %v157
    // Predicated region
    $region30: #{_mean_pool_agg.1} parent=1 // pred_check
      _
    $region31: #{_mean_pool_agg.1} parent=1 // pred_check_branch
      %162 = sbr.rel (0) target = $region33
    $region32: #{_mean_pool_agg.1} parent=1 // pred_region
      %164 = vsyncadd [#allocation4], 0
      %s166 = sshll.u32 [#allocation8], 4
      %s167 = int_to_ptr.vmem [resolvable:$true] %s166
      %s168 = sshll.u32 %s4, 4
      %s169 = int_to_ptr.hbm [resolvable:$true] %s168
      %171 = dma.vmem_to_hbm [thread:$0]  %s167, 32, %s169, [#allocation4]
    $region33: #{_mean_pool_agg.1} parent=1 // pred_fallthru
      _
    // Predicated region
    $region34: #{_mean_pool_agg.1} parent=1 // pred_check
      _
    $region35: #{_mean_pool_agg.1} parent=1 // pred_check_branch
      %173 = sbr.rel (0) target = $region37
    $region36: #{_mean_pool_agg.1} parent=1 // pred_region
      %175 = dma.done [#allocation4], 32
    $region37: #{_mean_pool_agg.1} parent=1 // pred_fallthru
      _
    %176 = vsyncpa [#allocation3], 1
    %177 = vsyncpa [#allocation6], 1
    %178 = vsyncpa [#allocation4], 1

</llo_original>
